<compile_context>
chip_gen: v5e
topology: v5e:2x2
jax: 0.10.0
libtpu: 0.0.40
codegen_flags: <defaults>
</compile_context>

<pallas_src>
import jax
import jax.numpy as jnp
from jax.experimental import pallas as pl
from jax.experimental.pallas import tpu as pltpu


def _identity_copy_kernel(x_hbm_ref, o_hbm_ref):
    """Whole-array HBM -> HBM copy via a single async DMA (no VMEM staging)."""

    def body(sem):
        copy = pltpu.make_async_copy(x_hbm_ref, o_hbm_ref, sem)
        copy.start()
        copy.wait()

    pl.run_scoped(body, pltpu.SemaphoreType.DMA)


def _pallas_identity_copy(x: jax.Array) -> jax.Array:
    """Pallas pass-through copy of x (used only when exercising the kernel)."""
    nbytes = x.size * jnp.dtype(x.dtype).itemsize
    return pl.pallas_call(
        _identity_copy_kernel,
        out_shape=jax.ShapeDtypeStruct(x.shape, x.dtype),
        in_specs=[pl.BlockSpec(memory_space=pl.ANY)],
        out_specs=pl.BlockSpec(memory_space=pl.ANY),
        cost_estimate=pl.CostEstimate(
            flops=0, transcendentals=0, bytes_accessed=2 * nbytes
        ),
    )(x)


def identity(x: jax.Array, *, exercise_kernel: bool = False) -> jax.Array:
    """nn.Identity forward: returns x.

    By default this is a zero-cost pass-through (`return x`).  Set
    `exercise_kernel=True` to route through the Pallas HBM->HBM DMA copy
    so the kernel itself is executed.
    """
    if not exercise_kernel or x.size == 0:
        return x
    return _pallas_identity_copy(x)


if __name__ == "__main__":
    key = jax.random.PRNGKey(0)
    # Small NCHW-style input consistent with a typical transfer-learning feature map.
    x = jax.random.normal(key, (2, 4, 16, 16), dtype=jnp.float32)

    # Fast path (true identity, no kernel).
    y_fast = identity(x)
    assert y_fast is x or bool(jnp.all(y_fast == x))

    # Pallas kernel path (explicitly exercised).
    y = identity(x, exercise_kernel=True)
    jax.block_until_ready(y)

    assert y.shape == x.shape and y.dtype == x.dtype
    assert bool(jnp.all(y == x))
    print("KERNEL_OK")
</pallas_src>

<mosaic_0001>
module attributes {stable_mosaic.version = 11 : i64} {
  func.func @_identity_copy_kernel(%arg0: memref<2x4x16x16xf32, #tpu.memory_space<any>>, %arg1: memref<2x4x16x16xf32, #tpu.memory_space<any>>) attributes {dimension_semantics = [], scalar_prefetch = 0 : i64, scratch_operands = 0 : i64, tpu.core_type = #tpu.core_type<tc>} {
    "tpu.region"() ({
      %0 = tpu.sem_alloc : memref<!tpu.dma_semaphore, #tpu.memory_space<semaphore_mem>>
      tpu.enqueue_dma source(%arg0 : memref<2x4x16x16xf32, #tpu.memory_space<any>>) target(%arg1 : memref<2x4x16x16xf32, #tpu.memory_space<any>>) target_semaphore(%0 : memref<!tpu.dma_semaphore, #tpu.memory_space<semaphore_mem>>)
      tpu.wait_dma2 semaphore(%0 : memref<!tpu.dma_semaphore, #tpu.memory_space<semaphore_mem>>) src(%arg0 : memref<2x4x16x16xf32, #tpu.memory_space<any>>) dst(%arg1 : memref<2x4x16x16xf32, #tpu.memory_space<any>>)
      tpu.yield
    }) : () -> ()
    return
  }
}

</mosaic_0001>

<llo_original>
// kernel: tpu_custom_call.1
$region0: #{tpu_custom_call.1}
  #allocation0 [shape = 'u32[]', space=smem, size = 0x4, offset = 0x4, fixed_abs, tag = 'smem constant byte address 0x4 - core index']
  #allocation1 [shape = 'u32[72,128]{1,0:T(1,128)}', space=vmem, size = 0x9000, scoped, tag = 'internal scratch']
  #allocation3 [shape = 's32[]', space=sflag, size = 0x4, offset = 0, fixed_abs, tag = 'sflag constant byte address 0x0 - dummy sync flag']
  #allocation4 [shape = 'u32[0]{0}', space=smem, size = 0, offset = 0, fixed_abs, tag = 'smem constant byte address 0x0 - null']
  %s0 = inlined_call_operand.hbm [shape: f32[2,4,16,16], index: 0, kind: input, shape index: {}]
  %s1 = inlined_call_operand.hbm [shape: f32[2,4,16,16], index: 1, kind: output, shape index: {}]
  %s2 = sld [smem:[#allocation0]]
  $region3: #{tpu_custom_call.1} parent=0
    _
  %s4 = ssub.s32 1, %s2
  %s5 = scalar_select 0, %s4, %s2
  $region2: #{tpu_custom_call.1} parent=0
    #allocation2 [shape = 's32[1]{0}', space=sflag, size = 0x4, scoped, tag = 'scoped memory for tpu_custom_call.1']
    %s7 = sshll.u32 1, 14
    %s8 = sxor.u32 4294967295, %s7
    %s10 = sshll.u32 %s0, 4
    %s11 = int_to_ptr.hbm [resolvable:$true] %s10
    %s12 = sshll.u32 %s1, 4
    %s13 = int_to_ptr.hbm [resolvable:$true] %s12
    %16 = dma.general %s11, 2048, %s13, [#allocation2], [#allocation3], [#allocation4], 0, 0
    %s17 = smul.u32 2, 4
    %s18 = smul.u32 %s17, 16
    %s19 = smul.u32 %s18, 1
    %s20 = sshll.u32 %s19, 4
    %21 = dma.done [#allocation2], %s20

</llo_original>
